<compile_context>
chip_gen: v5e
topology: v5e:2x2
jax: 0.10.0
libtpu: 0.0.40
codegen_flags: <defaults>
</compile_context>

<pallas_src>
import jax
import jax.numpy as jnp
from jax.experimental import pallas as pl
from jax.experimental.pallas import tpu as pltpu

LANES = 128
# 4096 rows * 128 lanes * 4 B = 2 MiB per buffer (f32); with input + output
# each double-buffered that is 8 MiB of VMEM -> fits every generation's
# scoped-VMEM default (16 MiB v5e, 32 MiB v6e/v7x) with no override needed.
_TARGET_BLOCK_ROWS = 4096


def _modified_sigmoid_kernel(alpha_ref, x_ref, o_ref):
    # alpha_ref: (1,) fp32 scalar in SMEM
    # x_ref / o_ref: (block_rows, 128) tiles in VMEM
    a = alpha_ref[0]
    x = x_ref[...].astype(jnp.float32)
    # 2*sigmoid(a*x) - 1 == tanh(0.5*a*x): one EUP op instead of exp + recip
    # plus extra VPU mul/sub.  Compute in fp32 (alpha stays fp32), cast on store.
    o_ref[...] = jnp.tanh(0.5 * a * x).astype(o_ref.dtype)


def _round_up(n, m):
    return ((n + m - 1) // m) * m


def modified_sigmoid(x, alpha):
    """Elementwise 2*sigmoid(alpha*x) - 1 via a Pallas TPU kernel.

    x:      any-shaped float array (e.g. NCHW activation)
    alpha:  shape-(1,) learnable scalar parameter (kept in fp32)
    """
    orig_shape = x.shape
    n = x.size
    if n == 0:
        return x

    # dtype-aware sublane packing: 8 rows for 4-byte, 16 for 2-byte, 32 for 1-byte
    itemsize = jnp.dtype(x.dtype).itemsize
    sublanes = 8 * max(1, 4 // itemsize)

    rows = pl.cdiv(n, LANES)
    # Balanced blocks: split rows into grid steps of <= _TARGET_BLOCK_ROWS,
    # each rounded up to the sublane multiple, so row padding is at most a
    # few rows per block (no "shrink until it divides" perf cliff).
    num_blocks = max(1, pl.cdiv(rows, _TARGET_BLOCK_ROWS))
    block_rows = _round_up(pl.cdiv(rows, num_blocks), sublanes)
    rows_padded = num_blocks * block_rows
    n_padded = rows_padded * LANES

    flat = x.reshape(-1)
    if n_padded != n:
        flat = jnp.pad(flat, (0, n_padded - n))  # only when not already aligned
    x2d = flat.reshape(rows_padded, LANES)

    alpha_arr = jnp.asarray(alpha, dtype=jnp.float32).reshape(1)

    out2d = pl.pallas_call(
        _modified_sigmoid_kernel,
        out_shape=jax.ShapeDtypeStruct((rows_padded, LANES), x.dtype),
        grid=(num_blocks,),
        in_specs=[
            pl.BlockSpec(memory_space=pltpu.SMEM),                 # alpha (fp32 scalar)
            pl.BlockSpec((block_rows, LANES), lambda i: (i, 0)),   # x tile
        ],
        out_specs=pl.BlockSpec((block_rows, LANES), lambda i: (i, 0)),
        compiler_params=pltpu.CompilerParams(
            dimension_semantics=("parallel",),   # shards blocks across TCs on v7x
        ),
    )(alpha_arr, x2d)

    if n_padded != n:
        out = out2d.reshape(-1)[:n].reshape(orig_shape)
    else:
        out = out2d.reshape(orig_shape)          # free contiguous reshape, no copy
    return out


if __name__ == "__main__":
    key = jax.random.PRNGKey(0)
    # Module __init__: alpha = nn.Parameter(torch.tensor([1.0])) -> shape (1,)
    alpha = jnp.array([1.0], dtype=jnp.float32)

    # Small NCHW activation consistent with typical usage
    x = jax.random.normal(key, (2, 4, 16, 16), dtype=jnp.float32)

    y = jax.block_until_ready(modified_sigmoid(x, alpha))

    # Cross-check against the module's exact formulation
    y_ref = 2.0 * jax.nn.sigmoid(alpha[0] * x) - 1.0
    assert y.shape == x.shape and y.dtype == x.dtype
    assert jnp.allclose(y, y_ref, atol=1e-5, rtol=1e-5)

    print("KERNEL_OK")
</pallas_src>

<mosaic_0001>
module attributes {stable_mosaic.version = 11 : i64} {
  func.func @_modified_sigmoid_kernel(%arg0: i32, %arg1: memref<1xf32, #tpu.memory_space<smem>>, %arg2: memref<16x128xf32, #tpu.memory_space<vmem>>, %arg3: memref<16x128xf32, #tpu.memory_space<vmem>>) attributes {dimension_semantics = [#tpu.dimension_semantics<parallel>], iteration_bounds = array<i64: 1>, scalar_prefetch = 0 : i64, scratch_operands = 0 : i64, tpu.core_type = #tpu.core_type<tc>, window_params = [{transform_indices = @transform_0, window_bounds = array<i64: 1>}, {transform_indices = @transform_1, window_bounds = array<i64: 16, 128>}, {transform_indices = @transform_2, window_bounds = array<i64: 16, 128>}]} {
    %c0 = arith.constant 0 : index
    %0 = memref.load %arg1[%c0] : memref<1xf32, #tpu.memory_space<smem>>
    %c0_0 = arith.constant 0 : index
    %c0_1 = arith.constant 0 : index
    %1 = vector.load %arg2[%c0_0, %c0_1] : memref<16x128xf32, #tpu.memory_space<vmem>>, vector<16x128xf32>
    %cst = arith.constant 5.000000e-01 : f32
    %2 = arith.mulf %cst, %0 : f32
    %3 = vector.broadcast %2 : f32 to vector<16x128xf32>
    %4 = arith.mulf %3, %1 : vector<16x128xf32>
    %5 = math.tanh %4 : vector<16x128xf32>
    %c0_2 = arith.constant 0 : index
    %c0_3 = arith.constant 0 : index
    %6 = vector.load %arg3[%c0_2, %c0_3] : memref<16x128xf32, #tpu.memory_space<vmem>>, vector<16x128xf32>
    tpu.vector_store %arg3[%c0_2, %c0_3], %5 {strides = array<i32>} : memref<16x128xf32, #tpu.memory_space<vmem>>, vector<16x128xf32>,
    return
  }
  func.func @transform_0(%arg0: i32) -> i32 {
    %c0_i32 = arith.constant 0 : i32
    %c0_i32_0 = arith.constant 0 : i32
    return %c0_i32 : i32
  }
  func.func @transform_1(%arg0: i32) -> (i32, i32) {
    %c0_i32 = arith.constant 0 : i32
    %c0_i32_0 = arith.constant 0 : i32
    return %arg0, %c0_i32 : i32, i32
  }
  func.func @transform_2(%arg0: i32) -> (i32, i32) {
    %c0_i32 = arith.constant 0 : i32
    %c0_i32_0 = arith.constant 0 : i32
    return %arg0, %c0_i32 : i32, i32
  }
}

</mosaic_0001>

<llo_original>
// kernel: tpu_custom_call.1
$region0: #{tpu_custom_call.1}
  #allocation0 [shape = 'u32[]', space=smem, size = 0x4, offset = 0x4, fixed_abs, tag = 'smem constant byte address 0x4 - core index']
  #allocation1 [shape = 'u32[72,128]{1,0:T(1,128)}', space=vmem, size = 0x9000, scoped, tag = 'internal scratch']
  #allocation2 [shape = 'f32[1]{0:T(128)S(6)}', space=smem, size = 0x200, scoped, tag = 'scoped memory for tpu_custom_call.1']
  %s0 = inlined_call_operand.<no memory space> [shape: f32[1], index: 0, kind: input, shape index: {}]
  %s1 = inlined_call_operand.hbm [shape: f32[16,128], index: 1, kind: input, shape index: {}]
  %s2 = inlined_call_operand.hbm [shape: f32[16,128], index: 2, kind: output, shape index: {}]
  %s3 = sld [smem:[#allocation0]]
  $region22: #{tpu_custom_call.1} parent=0
    _
  %s5 = ssub.s32 1, %s3
  %s6 = scalar_select 0, %s5, %s3
  %7 = sst [smem:[#allocation2]] %s0
  $region1: #{tpu_custom_call.1} parent=0
    #allocation3 [shape = 'u8[8192]{0}', space=vmem, size = 0x2000, scoped, tag = 'input window, operand 1, single buffered']
    #allocation4 [shape = 's32[1]{0}', space=sflag, size = 0x4, scoped, tag = 'scoped memory for tpu_custom_call.1']
    #allocation5 [shape = 's32[1]{0}', space=sflag, size = 0x4, scoped, tag = 'scoped memory for tpu_custom_call.1']
    #allocation6 [shape = 'u8[8192]{0}', space=vmem, size = 0x2000, scoped, tag = 'output window, operand 0, single buffered']
    %8 = vsyncpa [#allocation4], 0
    %9 = vsyncpa [#allocation5], 0
    // Predicated region
    $region2: #{tpu_custom_call.1} parent=1 // pred_check
      _
    $region3: #{tpu_custom_call.1} parent=1 // pred_check_branch
      %11 = sbr.rel (0) target = $region5
    $region4: #{tpu_custom_call.1} parent=1 // pred_region
      _
    $region5: #{tpu_custom_call.1} parent=1 // pred_fallthru
      _
    // Predicated region
    $region6: #{tpu_custom_call.1} parent=1 // pred_check
      _
    $region7: #{tpu_custom_call.1} parent=1 // pred_check_branch
      %13 = sbr.rel (0) target = $region9
    $region8: #{tpu_custom_call.1} parent=1 // pred_region
      %15 = vsyncadd [#allocation4], 0
      %s16 = sshll.u32 %s1, 4
      %s17 = int_to_ptr.hbm [resolvable:$true] %s16
      %s18 = sshll.u32 [#allocation3], 4
      %s19 = int_to_ptr.vmem [resolvable:$true] %s18
      %24 = dma.hbm_to_vmem [thread:$0]  %s17, 256, %s19, [#allocation4], 128, 128, 8
    $region9: #{tpu_custom_call.1} parent=1 // pred_fallthru
      _
    // Predicated region
    $region10: #{tpu_custom_call.1} parent=1 // pred_check
      _
    $region11: #{tpu_custom_call.1} parent=1 // pred_check_branch
      %26 = sbr.rel (0) target = $region13
    $region12: #{tpu_custom_call.1} parent=1 // pred_region
      %28 = dma.done [#allocation4], 256
    $region13: #{tpu_custom_call.1} parent=1 // pred_fallthru
      _
    %s29 = sld [smem:[#allocation2]]
    %v30 = vld [vmem:[#allocation3] sm:$0xff]
    %v31 = vld [vmem:[#allocation3 + $0x8] sm:$0xff]
    %s32 = smul.f32 %s29, 0.5
    %v33 = vstv %s32
    %v34 = vmul.f32 %v33, %v30
    %v35 = vmul.f32 %v33, %v31
    %v36 = vtanh.pop %v34
    %v37 = vtanh.pop %v35
    %38 = vst [vmem:[#allocation6] sm:$0xff] %v36
    %39 = vst [vmem:[#allocation6 + $0x8] sm:$0xff] %v37
    // Predicated region
    $region14: #{tpu_custom_call.1} parent=1 // pred_check
      _
    $region15: #{tpu_custom_call.1} parent=1 // pred_check_branch
      %41 = sbr.rel (0) target = $region17
    $region16: #{tpu_custom_call.1} parent=1 // pred_region
      %43 = vsyncadd [#allocation5], 0
      %s44 = sshll.u32 [#allocation6], 4
      %s45 = int_to_ptr.vmem [resolvable:$true] %s44
      %s46 = sshll.u32 %s2, 4
      %s47 = int_to_ptr.hbm [resolvable:$true] %s46
      %52 = dma.vmem_to_hbm [thread:$0]  %s45, 256, %s47, [#allocation5], 128, 128, 8
    $region17: #{tpu_custom_call.1} parent=1 // pred_fallthru
      _
    // Predicated region
    $region18: #{tpu_custom_call.1} parent=1 // pred_check
      _
    $region19: #{tpu_custom_call.1} parent=1 // pred_check_branch
      %54 = sbr.rel (0) target = $region21
    $region20: #{tpu_custom_call.1} parent=1 // pred_region
      %56 = dma.done [#allocation5], 256
    $region21: #{tpu_custom_call.1} parent=1 // pred_fallthru
      _
    %57 = vsyncpa [#allocation4], 1
    %58 = vsyncpa [#allocation5], 1

</llo_original>
